<compile_context>
chip_gen: v5e
topology: v5e:2x2
jax: 0.10.0
libtpu: 0.0.40
codegen_flags: <defaults>
</compile_context>

<pallas_src>
import functools

import jax
import jax.numpy as jnp
from jax.experimental import pallas as pl
from jax.experimental.pallas import tpu as pltpu


def _round_up(v, m):
    return (v + m - 1) // m * m


def _clamp_vmem(nbytes, headroom=4 << 20):
    # Keep the request within what every TPU generation provides
    # (v7x has 64 MiB of VMEM per TensorCore).
    return int(max(min(nbytes + headroom, 64 << 20), 16 << 20))


# ---------------------------------------------------------------------------
# Fused path: whole (C, N) slab per batch resident in VMEM, grid = (B,)
# ---------------------------------------------------------------------------
def cam_fused_kernel(gamma_ref, x_ref, o_ref, *, compute_dtype, approx_recip):
    x = x_ref[...]                                    # (C, n_pad)
    xw = x.astype(compute_dtype)
    # energy = x @ x^T without materializing the transpose: contract the lane
    # (N) dim of both operands directly on the MXU. Zero-padded N columns
    # contribute nothing, so energy is exact.
    energy = jax.lax.dot_general(
        xw, xw,
        dimension_numbers=(((1,), (1,)), ((), ())),
        preferred_element_type=jnp.float32,
    )                                                 # (C, C) f32
    # softmax(rowmax(E) - E) == softmax(-E); stabilize with a single rowmin:
    z = jnp.min(energy, axis=-1, keepdims=True) - energy
    ez = jnp.exp(z)
    denom = jnp.sum(ez, axis=-1, keepdims=True)
    attn = ez * pl.reciprocal(denom, approx=approx_recip)
    out = jnp.dot(attn.astype(compute_dtype), xw,
                  preferred_element_type=jnp.float32)  # (C, n_pad) f32
    o_ref[...] = (gamma_ref[0] * out + x.astype(jnp.float32)).astype(o_ref.dtype)


# ---------------------------------------------------------------------------
# Streaming pass 1: energy accumulation over N tiles + channel softmax
# ---------------------------------------------------------------------------
def cam_attention_kernel(x_ref, attn_ref, energy_acc, *, compute_dtype, approx_recip):
    nj = pl.program_id(1)

    @pl.when(nj == 0)
    def _init():
        energy_acc[...] = jnp.zeros_like(energy_acc)

    xw = x_ref[...].astype(compute_dtype)             # (C, tile_n)
    energy_acc[...] += jax.lax.dot_general(
        xw, xw,
        dimension_numbers=(((1,), (1,)), ((), ())),
        preferred_element_type=jnp.float32,
    )

    @pl.when(nj == pl.num_programs(1) - 1)
    def _finalize():
        energy = energy_acc[...]                      # (C, C) f32
        z = jnp.min(energy, axis=-1, keepdims=True) - energy
        ez = jnp.exp(z)
        denom = jnp.sum(ez, axis=-1, keepdims=True)
        attn = ez * pl.reciprocal(denom, approx=approx_recip)
        attn_ref[...] = attn.astype(attn_ref.dtype)


# ---------------------------------------------------------------------------
# Streaming pass 2: out_tile = gamma * (attention @ x_tile) + x_tile
# ---------------------------------------------------------------------------
def cam_apply_kernel(gamma_ref, attn_ref, x_ref, o_ref, *, compute_dtype):
    x = x_ref[...]                                    # (C, tile_n)
    out = jnp.dot(
        attn_ref[...].astype(compute_dtype),
        x.astype(compute_dtype),
        preferred_element_type=jnp.float32,
    )
    o_ref[...] = (gamma_ref[0] * out + x.astype(jnp.float32)).astype(o_ref.dtype)


# ---------------------------------------------------------------------------
# Wrapper
# ---------------------------------------------------------------------------
def cam_module(x, gamma, *, compute_dtype=jnp.bfloat16, approx_recip=True,
               max_tile_n=1024, fused_vmem_budget=48 << 20, force_streaming=False):
    """Channel attention (CAM_Module forward).

    x: (B, C, H, W); gamma: (1,). Returns (B, C, H, W) in x.dtype.
    compute_dtype: MXU operand dtype (bf16 default; jnp.float32 for a
    bit-accurate path). Softmax and residual always run in f32.
    """
    B, C, H, W = x.shape
    N = H * W
    x_flat = x.reshape(B, C, N)
    gamma = jnp.asarray(gamma, jnp.float32).reshape(1)

    # Lane-dense spatial dim: pad N to a multiple of 128 and of the tile size.
    # Zero padding is semantics-preserving: zero columns contribute nothing to
    # the energy, and the padded output columns are sliced off afterwards.
    tile_n = min(max_tile_n, _round_up(N, 128))
    n_pad = _round_up(N, tile_n)
    if n_pad != N:
        x_flat = jnp.pad(x_flat, ((0, 0), (0, 0), (0, n_pad - N)))
    n_tiles = n_pad // tile_n
    # TODO(synk): C is kept whole (padding C would change the channel softmax);
    # extreme C where the (C, C) matrix no longer fits VMEM would need a
    # masked / C-tiled variant.

    elt = x_flat.dtype.itemsize
    cd = jnp.dtype(compute_dtype).itemsize

    # ---- fused single-pass path (static trace-time decision) -----------------
    fused_bytes = (
        4 * C * n_pad * elt            # x in + out blocks (double-buffered)
        + C * n_pad * (cd + 4)         # casted MXU operand + f32 matmul result
        + 4 * C * C * 4 + C * C * cd   # energy + softmax temps + attn cast copy
    )
    if (not force_streaming) and fused_bytes + (4 << 20) <= fused_vmem_budget:
        out_flat = pl.pallas_call(
            functools.partial(cam_fused_kernel,
                              compute_dtype=compute_dtype,
                              approx_recip=approx_recip),
            out_shape=jax.ShapeDtypeStruct((B, C, n_pad), x.dtype),
            grid_spec=pltpu.PrefetchScalarGridSpec(
                num_scalar_prefetch=0,
                grid=(B,),
                in_specs=[
                    pl.BlockSpec(memory_space=pltpu.MemorySpace.SMEM),            # gamma
                    pl.BlockSpec((pl.Squeezed(), C, n_pad), lambda b: (b, 0, 0)),  # x
                ],
                out_specs=pl.BlockSpec((pl.Squeezed(), C, n_pad), lambda b: (b, 0, 0)),
            ),
            compiler_params=pltpu.CompilerParams(
                dimension_semantics=("parallel",),
                vmem_limit_bytes=_clamp_vmem(fused_bytes),
            ),
        )(gamma, x_flat)
        if n_pad != N:
            out_flat = out_flat[:, :, :N]
        return out_flat.reshape(B, C, H, W)

    # ---- streaming pass 1: attention = softmax(rowmin(E) - E), E = x @ x^T ---
    vmem1 = _clamp_vmem(
        2 * C * tile_n * elt          # double-buffered x tile
        + C * tile_n * cd             # casted MXU operand
        + 2 * C * C * cd              # attn out buffers
        + 5 * C * C * 4               # f32 accumulator + softmax temps
    )
    attn = pl.pallas_call(
        functools.partial(cam_attention_kernel,
                          compute_dtype=compute_dtype,
                          approx_recip=approx_recip),
        out_shape=jax.ShapeDtypeStruct((B, C, C), compute_dtype),
        grid_spec=pltpu.PrefetchScalarGridSpec(
            num_scalar_prefetch=0,
            grid=(B, n_tiles),
            in_specs=[
                pl.BlockSpec((pl.Squeezed(), C, tile_n), lambda b, j: (b, 0, j)),
            ],
            out_specs=pl.BlockSpec((pl.Squeezed(), C, C), lambda b, j: (b, 0, 0)),
            scratch_shapes=[pltpu.VMEM((C, C), jnp.float32)],
        ),
        compiler_params=pltpu.CompilerParams(
            dimension_semantics=("parallel", "arbitrary"),
            vmem_limit_bytes=vmem1,
        ),
    )(x_flat)

    # ---- streaming pass 2: out = gamma * (attention @ x) + x -----------------
    vmem2 = _clamp_vmem(
        3 * C * C * cd                             # attn in buffers (+ cast copy)
        + 4 * C * tile_n * elt                     # x in + out (double-buffered)
        + C * tile_n * cd + 2 * C * tile_n * 4     # cast copy + f32 temps
    )
    out_flat = pl.pallas_call(
        functools.partial(cam_apply_kernel, compute_dtype=compute_dtype),
        out_shape=jax.ShapeDtypeStruct((B, C, n_pad), x.dtype),
        grid_spec=pltpu.PrefetchScalarGridSpec(
            num_scalar_prefetch=0,
            grid=(B, n_tiles),
            in_specs=[
                pl.BlockSpec(memory_space=pltpu.MemorySpace.SMEM),                 # gamma
                pl.BlockSpec((pl.Squeezed(), C, C), lambda b, j: (b, 0, 0)),       # attention
                pl.BlockSpec((pl.Squeezed(), C, tile_n), lambda b, j: (b, 0, j)),  # x tile
            ],
            out_specs=pl.BlockSpec((pl.Squeezed(), C, tile_n), lambda b, j: (b, 0, j)),
        ),
        compiler_params=pltpu.CompilerParams(
            # Both axes independent -> megacore / dual-TC can split either one,
            # so B == 1 inference still feeds both v7x TensorCores.
            dimension_semantics=("parallel", "parallel"),
            vmem_limit_bytes=vmem2,
        ),
    )(gamma, attn, x_flat)

    if n_pad != N:
        out_flat = out_flat[:, :, :N]
    return out_flat.reshape(B, C, H, W)


# ---------------------------------------------------------------------------
# Pure-JAX references
# ---------------------------------------------------------------------------
def cam_reference(x, gamma):
    """Mirrors the PyTorch forward in f32."""
    B, C, H, W = x.shape
    q = x.reshape(B, C, -1)
    k = jnp.transpose(q, (0, 2, 1))
    energy = jnp.einsum("bcn,bnd->bcd", q, k)
    energy_new = jnp.max(energy, axis=-1, keepdims=True) - energy
    attn = jax.nn.softmax(energy_new, axis=-1)
    out = jnp.einsum("bcd,bdn->bcn", attn, q).reshape(B, C, H, W)
    return gamma[0] * out + x


def cam_reference_bf16(x, gamma):
    """Emulates the kernel's fast path: bf16 MXU operands, f32 accumulation,
    f32 softmax and residual."""
    B, C, H, W = x.shape
    q = x.reshape(B, C, -1)
    qb = q.astype(jnp.bfloat16)
    energy = jnp.einsum("bcn,bdn->bcd", qb, qb, preferred_element_type=jnp.float32)
    z = jnp.min(energy, axis=-1, keepdims=True) - energy
    ez = jnp.exp(z)
    attn = ez / jnp.sum(ez, axis=-1, keepdims=True)
    out = jnp.einsum("bcd,bdn->bcn", attn.astype(jnp.bfloat16), qb,
                     preferred_element_type=jnp.float32).reshape(B, C, H, W)
    return gamma[0] * out + x


if __name__ == "__main__":
    key = jax.random.PRNGKey(0)
    B, C, H, W = 2, 4, 16, 16
    x = jax.random.normal(key, (B, C, H, W), dtype=jnp.float32)

    gamma0 = jnp.zeros((1,), dtype=jnp.float32)      # module init: gamma = zeros(1)
    gamma1 = jnp.full((1,), 0.5, dtype=jnp.float32)  # exercise the attention path

    # Bit-accurate path vs the pure-JAX reference: fused and streaming variants.
    for g in (gamma0, gamma1):
        ref = cam_reference(x, g)
        out_fused = cam_module(x, g, compute_dtype=jnp.float32, approx_recip=False)
        jax.block_until_ready(out_fused)
        assert out_fused.shape == (B, C, H, W)
        assert jnp.allclose(out_fused, ref, atol=2e-5, rtol=2e-5)

        out_stream = cam_module(x, g, compute_dtype=jnp.float32, approx_recip=False,
                                force_streaming=True, max_tile_n=128)
        jax.block_until_ready(out_stream)
        assert out_stream.shape == (B, C, H, W)
        assert jnp.allclose(out_stream, ref, atol=2e-5, rtol=2e-5)

    # Default fast path (bf16 MXU operands + approx reciprocal) vs a reference
    # emulating bf16 matmul operands with f32 accumulation.
    ref_fast = cam_reference_bf16(x, gamma1)
    out_fast = cam_module(x, gamma1)
    jax.block_until_ready(out_fast)
    assert out_fast.shape == (B, C, H, W)
    assert jnp.allclose(out_fast, ref_fast, atol=1e-2, rtol=1e-2)

    out_fast_stream = cam_module(x, gamma1, force_streaming=True, max_tile_n=128)
    jax.block_until_ready(out_fast_stream)
    assert jnp.allclose(out_fast_stream, ref_fast, atol=1e-2, rtol=1e-2)

    print("KERNEL_OK")
</pallas_src>

<mosaic_0001>
module attributes {stable_mosaic.version = 11 : i64} {
  func.func @cam_fused_kernel(%arg0: i32, %arg1: memref<1xf32, #tpu.memory_space<smem>>, %arg2: memref<1x4x256xf32, #tpu.memory_space<vmem>>, %arg3: memref<1x4x256xf32, #tpu.memory_space<vmem>>) attributes {dimension_semantics = [#tpu.dimension_semantics<parallel>], iteration_bounds = array<i64: 2>, scalar_prefetch = 0 : i64, scratch_operands = 0 : i64, tpu.core_type = #tpu.core_type<tc>, window_params = [{transform_indices = @transform_0, window_bounds = array<i64: 1>}, {transform_indices = @transform_1, window_bounds = array<i64: 1, 4, 256>}, {transform_indices = @transform_2, window_bounds = array<i64: 1, 4, 256>}]} {
    %c0 = arith.constant 0 : index
    %c0_0 = arith.constant 0 : index
    %c0_1 = arith.constant 0 : index
    %0 = vector.load %arg2[%c0, %c0_0, %c0_1] : memref<1x4x256xf32, #tpu.memory_space<vmem>>, vector<1x4x256xf32>
    %1 = vector.shape_cast %0 : vector<1x4x256xf32> to vector<4x256xf32>
    %cst = arith.constant dense<0.000000e+00> : vector<4x4xf32>
    %2 = tpu.matmul %1, %1, %cst {dimension_numbers = #tpu.dot_dimension_numbers<[1], [1], [0], [0], [0, 0, 1, 0], [], []>} : vector<4x256xf32>, vector<4x256xf32>, vector<4x4xf32> -> vector<4x4xf32>
    %cst_2 = arith.constant dense<0x7F800000> : vector<4xf32>
    %3 = vector.multi_reduction <minimumf>, %2, %cst_2 [1] : vector<4x4xf32> to vector<4xf32>
    %4 = vector.shape_cast %3 : vector<4xf32> to vector<4x1xf32>
    %5 = vector.broadcast %4 : vector<4x1xf32> to vector<4x4xf32>
    %6 = arith.subf %5, %2 : vector<4x4xf32>
    %7 = math.exp %6 : vector<4x4xf32>
    %cst_3 = arith.constant dense<0.000000e+00> : vector<4xf32>
    %8 = vector.multi_reduction <add>, %7, %cst_3 [1] : vector<4x4xf32> to vector<4xf32>
    %9 = vector.shape_cast %8 : vector<4xf32> to vector<4x1xf32>
    %10 = tpu.reciprocal %9 : vector<4x1xf32> -> vector<4x1xf32>
    %11 = vector.broadcast %10 : vector<4x1xf32> to vector<4x4xf32>
    %12 = arith.mulf %7, %11 : vector<4x4xf32>
    %cst_4 = arith.constant dense<0.000000e+00> : vector<4x256xf32>
    %13 = tpu.matmul %12, %1, %cst_4 {dimension_numbers = #tpu.dot_dimension_numbers<[1], [0], [0], [1], [0, 0, 1, 1], [], []>} : vector<4x4xf32>, vector<4x256xf32>, vector<4x256xf32> -> vector<4x256xf32>
    %c0_5 = arith.constant 0 : index
    %14 = memref.load %arg1[%c0_5] : memref<1xf32, #tpu.memory_space<smem>>
    %15 = vector.broadcast %14 : f32 to vector<4x256xf32>
    %16 = arith.mulf %15, %13 : vector<4x256xf32>
    %17 = arith.addf %16, %1 : vector<4x256xf32>
    %c0_6 = arith.constant 0 : index
    %c0_7 = arith.constant 0 : index
    %c0_8 = arith.constant 0 : index
    %18 = vector.load %arg3[%c0_6, %c0_7, %c0_8] : memref<1x4x256xf32, #tpu.memory_space<vmem>>, vector<1x4x256xf32>
    %19 = vector.shape_cast %18 : vector<1x4x256xf32> to vector<4x256xf32>
    %20 = vector.shape_cast %17 : vector<4x256xf32> to vector<1x4x256xf32>
    tpu.vector_store %arg3[%c0_6, %c0_7, %c0_8], %20 {strides = array<i32>} : memref<1x4x256xf32, #tpu.memory_space<vmem>>, vector<1x4x256xf32>,
    return
  }
  func.func @transform_0(%arg0: i32) -> i32 {
    %c0_i32 = arith.constant 0 : i32
    %c0_i32_0 = arith.constant 0 : i32
    return %c0_i32 : i32
  }
  func.func @transform_1(%arg0: i32) -> (i32, i32, i32) {
    %c0_i32 = arith.constant 0 : i32
    %c0_i32_0 = arith.constant 0 : i32
    %c0_i32_1 = arith.constant 0 : i32
    return %arg0, %c0_i32, %c0_i32_0 : i32, i32, i32
  }
  func.func @transform_2(%arg0: i32) -> (i32, i32, i32) {
    %c0_i32 = arith.constant 0 : i32
    %c0_i32_0 = arith.constant 0 : i32
    %c0_i32_1 = arith.constant 0 : i32
    return %arg0, %c0_i32, %c0_i32_0 : i32, i32, i32
  }
}

</mosaic_0001>

<llo_original>
// kernel: tpu_custom_call.1
$region0: #{tpu_custom_call.1}
  #allocation0 [shape = 'u32[]', space=smem, size = 0x4, offset = 0x4, fixed_abs, tag = 'smem constant byte address 0x4 - core index']
  #allocation1 [shape = 'u32[72,128]{1,0:T(1,128)}', space=vmem, size = 0x9000, scoped, tag = 'internal scratch']
  #allocation2 [shape = 'f32[1]{0:T(128)S(6)}', space=smem, size = 0x200, scoped, tag = 'scoped memory for tpu_custom_call.1']
  %s0 = inlined_call_operand.<no memory space> [shape: f32[1], index: 0, kind: input, shape index: {}]
  %s1 = inlined_call_operand.hbm [shape: f32[2,4,256], index: 1, kind: input, shape index: {}]
  %s2 = inlined_call_operand.hbm [shape: f32[2,4,256], index: 2, kind: output, shape index: {}]
  %s3 = sld [smem:[#allocation0]]
  $region45: #{tpu_custom_call.1} parent=0
    _
  %s5 = ssub.s32 1, %s3
  %s6 = scalar_select 0, %s5, %s3
  %7 = sst [smem:[#allocation2]] %s0
  $region1: #{tpu_custom_call.1} parent=0
    #allocation3 [shape = 'u8[8192]{0}', space=vmem, size = 0x2000, scoped, tag = 'input window, operand 1']
    #allocation4 [shape = 's32[2]{0}', space=sflag, size = 0x8, scoped, tag = 'scoped memory for tpu_custom_call.1']
    #allocation5 [shape = 's32[2]{0}', space=sflag, size = 0x8, scoped, tag = 'scoped memory for tpu_custom_call.1']
    #allocation6 [shape = 'u8[8192]{0}', space=vmem, size = 0x2000, scoped, tag = 'output window, operand 0']
    %8 = vsyncpa [#allocation4], 0
    %s9 = scalar_lea.sflag [#allocation4], 1
    %10 = vsyncpa %s9, 0
    %11 = vsyncpa [#allocation5], 0
    %s12 = scalar_lea.sflag [#allocation5], 1
    %13 = vsyncpa %s12, 0
    loop: start=0, step=1, limit=4
    $region2: #{tpu_custom_call.1} parent=1 // loop_pre_header
      _
    $region3: #{tpu_custom_call.1} parent=1 // loop_header
      %s15 = sphi 0, %s19
      %p16 = scmp.ge.s32.totalorder %s15, 4
      %s23 = sphi 0, %s23
      %s25 = sphi 0, %s23
      %s26 = sphi 0, %s25
      %s40 = sphi 0, %s26
      %s46 = sphi 0, %s48
      %s49 = sphi 0, %s46
      %s50 = sphi 0, %s49
      %s66 = sphi 0, %s50
      %s72 = sphi 0, %s74
      %s75 = sphi 0, %s72
      %s76 = sphi 0, %s75
      %s92 = sphi 0, %s76
    $region4: #{tpu_custom_call.1} parent=1 // loop_header_branch
      %18 = sbr.rel (%p16) target = $region8
    $region5: #{tpu_custom_call.1} parent=1 // loop_body
      %s20 = ssub.s32 %s15, 1
      %s21 = ssub.s32 %s15, 2
      %s22 = sadd.s32 %s15, 1
      %s24 = sadd.s32 %s23, 1
      %p27 = scmp.eq.s32.totalorder %s15, 1
      %p28 = scmp.ne.s32.totalorder %s23, %s25
      %p29 = scmp.eq.s32.totalorder %s15, 0
      %p30 = por %p28, %p29
      %p31 = scmp.ne.s32.totalorder %s23, %s25
      %p32 = scmp.eq.s32.totalorder %s20, 1
      %p33 = por %p31, %p32
      %p34 = scmp.ne.s32.totalorder %s25, %s26
      %p35 = scmp.eq.s32.totalorder %s20, 0
      %p36 = por %p34, %p35
      %p37 = scmp.ne.s32.totalorder %s25, %s26
      %p38 = scmp.eq.s32.totalorder %s21, 1
      %p39 = por %p37, %p38
      %p41 = scmp.ne.s32.totalorder %s26, %s40
      %p42 = scmp.eq.s32.totalorder %s21, 0
      %p43 = por %p41, %p42
      %s44 = ssub.s32 %s15, %s22
      %p45 = scmp.eq.s32.totalorder %s44, 0
      %s47 = sadd.s32 %s46, 1
      %s48 = scalar_select %p45, %s46, %s47
      %p51 = pneg %p45
      %p52 = scmp.eq.s32.totalorder %s15, 1
      %p53 = por %p51, %p52
      %p54 = scmp.ne.s32.totalorder %s46, %s49
      %p55 = scmp.eq.s32.totalorder %s15, 0
      %p56 = por %p54, %p55
      %p57 = scmp.ne.s32.totalorder %s46, %s49
      %p58 = scmp.eq.s32.totalorder %s20, 1
      %p59 = por %p57, %p58
      %p60 = scmp.ne.s32.totalorder %s49, %s50
      %p61 = scmp.eq.s32.totalorder %s20, 0
      %p62 = por %p60, %p61
      %p63 = scmp.ne.s32.totalorder %s49, %s50
      %p64 = scmp.eq.s32.totalorder %s21, 1
      %p65 = por %p63, %p64
      %p67 = scmp.ne.s32.totalorder %s50, %s66
      %p68 = scmp.eq.s32.totalorder %s21, 0
      %p69 = por %p67, %p68
      %s70 = ssub.s32 %s15, %s22
      %p71 = scmp.eq.s32.totalorder %s70, 0
      %s73 = sadd.s32 %s72, 1
      %s74 = scalar_select %p71, %s72, %s73
      %p77 = pneg %p71
      %p78 = scmp.eq.s32.totalorder %s15, 1
      %p79 = por %p77, %p78
      %p80 = scmp.ne.s32.totalorder %s72, %s75
      %p81 = scmp.eq.s32.totalorder %s15, 0
      %p82 = por %p80, %p81
      %p83 = scmp.ne.s32.totalorder %s72, %s75
      %p84 = scmp.eq.s32.totalorder %s20, 1
      %p85 = por %p83, %p84
      %p86 = scmp.ne.s32.totalorder %s75, %s76
      %p87 = scmp.eq.s32.totalorder %s20, 0
      %p88 = por %p86, %p87
      %p89 = scmp.ne.s32.totalorder %s75, %s76
      %p90 = scmp.eq.s32.totalorder %s21, 1
      %p91 = por %p89, %p90
      %p93 = scmp.ne.s32.totalorder %s76, %s92
      %p94 = scmp.eq.s32.totalorder %s21, 0
      %p95 = por %p93, %p94
      %p96 = scmp.le.s32.totalorder 1, %s15
      %p97 = scmp.lt.s32.totalorder %s15, 3
      %p98 = pnand %p96, %p97
      %p99 = pneg %p98
      // Predicated region
      $region9: #{tpu_custom_call.1} parent=5 // pred_check
        _
      $region10: #{tpu_custom_call.1} parent=5 // pred_check_branch
        %101 = sbr.rel (%p98) target = $region12
      $region11: #{tpu_custom_call.1} parent=5 // pred_region
        %s102 = ssub.s32 %s15, 1
        // Predicated region
        $region13: #{tpu_custom_call.1} parent=11 // pred_check
          %p103 = pneg %p36
        $region14: #{tpu_custom_call.1} parent=11 // pred_check_branch
          %105 = sbr.rel (%p103) target = $region16
        $region15: #{tpu_custom_call.1} parent=11 // pred_region
          _
        $region16: #{tpu_custom_call.1} parent=11 // pred_fallthru
          _
      $region12: #{tpu_custom_call.1} parent=5 // pred_fallthru
        _
      %p106 = scmp.lt.s32.totalorder %s15, 2
      // Predicated region
      $region17: #{tpu_custom_call.1} parent=5 // pred_check
        %p107 = pneg %p106
      $region18: #{tpu_custom_call.1} parent=5 // pred_check_branch
        %109 = sbr.rel (%p107) target = $region20
      $region19: #{tpu_custom_call.1} parent=5 // pred_region
        // Predicated region
        $region21: #{tpu_custom_call.1} parent=19 // pred_check
          %p110 = pneg %p56
        $region22: #{tpu_custom_call.1} parent=19 // pred_check_branch
          %112 = sbr.rel (%p110) target = $region24
        $region23: #{tpu_custom_call.1} parent=19 // pred_region
          %s113 = sand.u32 %s46, 1
          %s114 = scalar_lea.sflag [#allocation4], %s113
          %s115 = sand.u32 %s46, 1
          %s116 = smul.addr %s115, 8
          %s117 = scalar_lea.vmem [#allocation3], %s116
          %119 = vsyncadd %s114, 0
          %s120 = smul.addr %s15, 2
          %s121 = smul.addr %s120, 4
          %s122 = scalar_lea.hbm %s1, %s121
          %s124 = sshll.u32 %s122, 4
          %s125 = int_to_ptr.hbm [resolvable:$true] %s124
          %s126 = sshll.u32 %s117, 4
          %s127 = int_to_ptr.vmem [resolvable:$true] %s126
          %129 = dma.hbm_to_vmem [thread:$0]  %s125, 128, %s127, %s114
        $region24: #{tpu_custom_call.1} parent=19 // pred_fallthru
          _
      $region20: #{tpu_custom_call.1} parent=5 // pred_fallthru
        _
      %p130 = scmp.le.s32.totalorder 1, %s15
      %p131 = scmp.lt.s32.totalorder %s15, 3
      %p132 = pnand %p130, %p131
      %p133 = pneg %p132
      // Predicated region
      $region25: #{tpu_custom_call.1} parent=5 // pred_check
        _
      $region26: #{tpu_custom_call.1} parent=5 // pred_check_branch
        %135 = sbr.rel (%p132) target = $region28
      $region27: #{tpu_custom_call.1} parent=5 // pred_region
        %s136 = ssub.s32 %s15, 1
        %s137 = sand.u32 %s49, 1
        %s138 = scalar_lea.sflag [#allocation4], %s137
        %s139 = sand.u32 %s49, 1
        %s140 = smul.addr %s139, 8
        %s141 = scalar_lea.vmem [#allocation3], %s140
        // Predicated region
        $region29: #{tpu_custom_call.1} parent=27 // pred_check
          %p142 = pneg %p62
        $region30: #{tpu_custom_call.1} parent=27 // pred_check_branch
          %144 = sbr.rel (%p142) target = $region32
        $region31: #{tpu_custom_call.1} parent=27 // pred_region
          %146 = dma.done %s138, 128
        $region32: #{tpu_custom_call.1} parent=27 // pred_fallthru
          _
        %p147 = pneg %p36
        %p148 = pneg %p33
        %s149 = sand.u32 %s49, 1
        %s150 = scalar_lea.sflag [#allocation4], %s149
        %s151 = sand.u32 %s49, 1
        %s152 = smul.addr %s151, 8
        %s153 = scalar_lea.vmem [#allocation3], %s152
        %p154 = pneg %p62
        %p155 = pneg %p59
        %p156 = pneg %p88
        %p157 = pneg %p85
        %s158 = sand.u32 %s75, 1
        %s159 = scalar_lea.sflag [#allocation5], %s158
        %s160 = sand.u32 %s75, 1
        %s161 = smul.addr %s160, 8
        %s162 = scalar_lea.vmem [#allocation6], %s161
        %v163 = vld [vmem:[%s141] sm:$0xff]
        %165 = vst [vmem:[#allocation1] ss:$2 sm:$0xff] %v163
        %v166 = vld.sshfl [vmem:[#allocation1] sm:$0xff pattern:$0x75316420]
        %v167 = vld.sshfl [vmem:[#allocation1 + $0x8] sm:$0xff pattern:$0x75316420]
        %170 = vst [vmem:[#allocation1] ss:$2 sm:$0xff] %v163
        %v171 = vld.sshfl [vmem:[#allocation1] sm:$0xff pattern:$0x75316420]
        %v172 = vld.sshfl [vmem:[#allocation1 + $0x8] sm:$0xff pattern:$0x75316420]
        %175 = vmatpush.xpose.msra.mxu0 0.0
        %176 = vmatpush.xpose.msra.mxu0 0.0
        %177 = vmatpush.xpose.msra.mxu0 0.0
        %178 = vmatpush.xpose.msra.mxu0 0.0
        %179 = vmatpush.xpose.msra.mxu0 0.0
        %180 = vmatpush.xpose.msra.mxu0 0.0
        %181 = vmatpush.xpose.msra.mxu0 0.0
        %182 = vmatpush.xpose.msra.mxu0 0.0
        %183 = vmatpush.xpose.msra.mxu0 0.0
        %184 = vmatpush.xpose.msra.mxu0 0.0
        %185 = vmatpush.xpose.msra.mxu0 0.0
        %186 = vmatpush.xpose.msra.mxu0 0.0
        %187 = vmatpush.xpose.msra.mxu0 0.0
        %188 = vmatpush.xpose.msra.mxu0 0.0
        %189 = vmatpush.xpose.msra.mxu0 0.0
        %190 = vmatpush.xpose.msra.mxu0 %v171
        %191 = vmatmul.f32.gmra.mxu0 %v166
        %v192 = vpop.f32.mrf.mxu0
        %v193 = vadd.f32 0.0, %v192
        %194 = vdwg.mxu0
        %195 = vmatpush.xpose.msra.mxu0 0.0
        %196 = vmatpush.xpose.msra.mxu0 0.0
        %197 = vmatpush.xpose.msra.mxu0 0.0
        %198 = vmatpush.xpose.msra.mxu0 0.0
        %199 = vmatpush.xpose.msra.mxu0 0.0
        %200 = vmatpush.xpose.msra.mxu0 0.0
        %201 = vmatpush.xpose.msra.mxu0 0.0
        %202 = vmatpush.xpose.msra.mxu0 0.0
        %203 = vmatpush.xpose.msra.mxu0 0.0
        %204 = vmatpush.xpose.msra.mxu0 0.0
        %205 = vmatpush.xpose.msra.mxu0 0.0
        %206 = vmatpush.xpose.msra.mxu0 0.0
        %207 = vmatpush.xpose.msra.mxu0 0.0
        %208 = vmatpush.xpose.msra.mxu0 0.0
        %209 = vmatpush.xpose.msra.mxu0 0.0
        %210 = vmatpush.xpose.msra.mxu0 %v172
        %211 = vmatmul.f32.gmra.mxu0 %v167
        %v212 = vpop.f32.mrf.mxu0
        %v213 = vadd.f32 %v193, %v212
        %214 = vdwg.mxu0
        %vm215 = vcmask 27648
        %v216 = vsel %vm215, %v213, inf
        %217 = vmin.xlane.f32.xlu0 %v216
        %v218 = vpop.xlane.xlu0 %217
        %v219 = vsub.f32 %v218, %v213
        %v220 = vmul.f32 %v219, 1.442695
        %v221 = vpow.pop %v220
        %v222 = vsel %vm215, %v221, 0.0
        %223 = vadd.xlane.f32.xlu0 %v222
        %v224 = vpop.xlane.xlu0 %223
        %v225 = vrcp.pop %v224
        %v226 = vmul.f32 %v224, %v225
        %v227 = vsub.f32 1.0, %v226
        %v228 = vmul.f32 %v225, %v227
        %v229 = vadd.f32 %v225, %v228
        %vm230 = vweird.f32 %v224
        %vm231 = vweird.f32 %v225
        %vm232 = vmor %vm230, %vm231
        %v233 = vsel %vm232, %v225, %v229
        %v234 = vand.u32 2147483647, %v224
        %vm235 = vcmp.eq.f32.partialorder %v234, 8.507059e+37
        %v236 = vand.u32 %v224, 2147483648
        %v237 = vor.u32 1.1754944e-38, %v236
        %v238 = vsel %vm235, %v237, %v233
        %v239 = vmul.f32 %v221, %v238
        %240 = vst [vmem:[#allocation1] ss:$2 sm:$0xff] %v163
        %v241 = vld.sshfl [vmem:[#allocation1] sm:$0xff pattern:$0x75316420]
        %v242 = vld.sshfl [vmem:[#allocation1 + $0x8] sm:$0xff pattern:$0x75316420]
        %vm243 = vcmask 31744
        %v245 = vsel %vm243, %v239, 0
        %vm247 = vcmask 1043456
        %v248 = vsel %vm247, %v241, 0
        %v250 = vsel %vm247, %v242, 0
        %252 = vmatpush.msra.mxu0 0.0
        %253 = vmatpush.msra.mxu0 0.0
        %254 = vmatpush.msra.mxu0 0.0
        %255 = vmatpush.msra.mxu0 0.0
        %256 = vmatpush.msra.mxu0 0.0
        %257 = vmatpush.msra.mxu0 0.0
        %258 = vmatpush.msra.mxu0 0.0
        %259 = vmatpush.msra.mxu0 0.0
        %260 = vmatpush.msra.mxu0 0.0
        %261 = vmatpush.msra.mxu0 0.0
        %262 = vmatpush.msra.mxu0 0.0
        %263 = vmatpush.msra.mxu0 0.0
        %264 = vmatpush.msra.mxu0 0.0
        %265 = vmatpush.msra.mxu0 0.0
        %266 = vmatpush.msra.mxu0 0.0
        %267 = vmatpush.msra.mxu0 %v248
        %268 = vmatmul.f32.gmra.mxu0 %v245
        %v269 = vpop.f32.mrf.mxu0
        %v270 = vadd.f32 0.0, %v269
        %271 = vdwg.mxu0
        %272 = vmatpush.msra.mxu0 0.0
        %273 = vmatpush.msra.mxu0 0.0
        %274 = vmatpush.msra.mxu0 0.0
        %275 = vmatpush.msra.mxu0 0.0
        %276 = vmatpush.msra.mxu0 0.0
        %277 = vmatpush.msra.mxu0 0.0
        %278 = vmatpush.msra.mxu0 0.0
        %279 = vmatpush.msra.mxu0 0.0
        %280 = vmatpush.msra.mxu0 0.0
        %281 = vmatpush.msra.mxu0 0.0
        %282 = vmatpush.msra.mxu0 0.0
        %283 = vmatpush.msra.mxu0 0.0
        %284 = vmatpush.msra.mxu0 0.0
        %285 = vmatpush.msra.mxu0 0.0
        %286 = vmatpush.msra.mxu0 0.0
        %287 = vmatpush.msra.mxu0 %v250
        %288 = vmatmul.f32.gmra.mxu0 %v245
        %v289 = vpop.f32.mrf.mxu0
        %v290 = vadd.f32 0.0, %v289
        %291 = vdwg.mxu0
        %s292 = sld [smem:[#allocation2]]
        %v293 = vstv %s292
        %v294 = vmul.f32 %v293, %v270
        %v295 = vmul.f32 %v293, %v290
        %296 = vst [vmem:[#allocation1] ss:$2 sm:$0xff] %v163
        %v297 = vld.sshfl [vmem:[#allocation1] sm:$0xff pattern:$0x75316420]
        %v298 = vld.sshfl [vmem:[#allocation1 + $0x8] sm:$0xff pattern:$0x75316420]
        %v301 = vadd.f32 %v294, %v297
        %v302 = vadd.f32 %v295, %v298
        %v305 = vrot.slane %v302, 4
        %v306 = vsel %vm247, %v301, %v305
        %308 = vst [vmem:[%s162] sm:$0xff] %v306
        %s309 = sand.u32 %s75, 1
        %s310 = scalar_lea.sflag [#allocation5], %s309
        %s311 = sand.u32 %s75, 1
        %s312 = smul.addr %s311, 8
        %s313 = scalar_lea.vmem [#allocation6], %s312
        // Predicated region
        $region33: #{tpu_custom_call.1} parent=27 // pred_check
          %p314 = pneg %p85
        $region34: #{tpu_custom_call.1} parent=27 // pred_check_branch
          %316 = sbr.rel (%p314) target = $region36
        $region35: #{tpu_custom_call.1} parent=27 // pred_region
          %318 = vsyncadd %s310, 0
          %s319 = smul.addr %s20, 2
          %s320 = smul.addr %s319, 4
          %s321 = scalar_lea.hbm %s2, %s320
          %s323 = sshll.u32 %s313, 4
          %s324 = int_to_ptr.vmem [resolvable:$true] %s323
          %s325 = sshll.u32 %s321, 4
          %s326 = int_to_ptr.hbm [resolvable:$true] %s325
          %328 = dma.vmem_to_hbm [thread:$0]  %s324, 128, %s326, %s310
        $region36: #{tpu_custom_call.1} parent=27 // pred_fallthru
          _
      $region28: #{tpu_custom_call.1} parent=5 // pred_fallthru
        _
      %p329 = scmp.le.s32.totalorder 2, %s15
      // Predicated region
      $region37: #{tpu_custom_call.1} parent=5 // pred_check
        %p330 = pneg %p329
      $region38: #{tpu_custom_call.1} parent=5 // pred_check_branch
        %332 = sbr.rel (%p330) target = $region40
      $region39: #{tpu_custom_call.1} parent=5 // pred_region
        %s333 = ssub.s32 %s15, 2
        // Predicated region
        $region41: #{tpu_custom_call.1} parent=39 // pred_check
          %p334 = pneg %p91
        $region42: #{tpu_custom_call.1} parent=39 // pred_check_branch
          %336 = sbr.rel (%p334) target = $region44
        $region43: #{tpu_custom_call.1} parent=39 // pred_region
          %s337 = sand.u32 %s76, 1
          %s338 = scalar_lea.sflag [#allocation5], %s337
          %s339 = sand.u32 %s76, 1
          %s340 = smul.addr %s339, 8
          %s341 = scalar_lea.vmem [#allocation6], %s340
          %343 = dma.done %s338, 128
        $region44: #{tpu_custom_call.1} parent=39 // pred_fallthru
          _
      $region40: #{tpu_custom_call.1} parent=5 // pred_fallthru
        _
    $region6: #{tpu_custom_call.1} parent=1 // loop_footer
      %s19 = sadd.s32 1, %s15
    $region7: #{tpu_custom_call.1} parent=1 // loop_footer_branch
      %14 = sbr.rel target = $region3
    $region8: #{tpu_custom_call.1} parent=1 // loop_exit
      _
    %344 = vsyncpa [#allocation4], 1
    %s345 = scalar_lea.sflag [#allocation4], 1
    %346 = vsyncpa %s345, 1
    %347 = vsyncpa [#allocation5], 1
    %s348 = scalar_lea.sflag [#allocation5], 1
    %349 = vsyncpa %s348, 1

</llo_original>
